<compile_context>
chip_gen: v7x
topology: tpu7x:2x2x1
jax: 0.10.0
libtpu: 0.0.40
codegen_flags: <defaults>
</compile_context>

<pallas_src>
import functools

import jax
import jax.numpy as jnp
from jax.experimental import pallas as pl
from jax.experimental.pallas import tpu as pltpu


_RH = 8     # frequency (sublane) halo rows in the staging plane (8-aligned)
_CH = 128   # time (lane) halo columns in the carry plane (128-aligned)


def _deepfilter_kernel(xr_ref, xi_ref, fr_ref, fi_ref, out_ref,
                       prow_ref, qcol_ref, *, L, I, D, Tt, nt):
    """Grid = (batch, time_tile + 1).  Per step:
      1. compute the two point-wise product planes for the current time tile,
      2. frequency (sublane) box-sum via a zero-row-halo staging plane
         (aligned stores, cheap shifted reads),
      3. at steps t >= 1 emit output tile t-1 from the carried q planes
         (q_{t-1} in the qcol interior, tail of q_{t-2} in the left halo,
          head of q_t in the right halo),
      4. update the carry for the next step.
    """
    t = pl.program_id(1)

    xr = xr_ref[...].astype(jnp.float32)
    xi = xi_ref[...].astype(jnp.float32)
    fr = fr_ref[...].astype(jnp.float32)
    fi = fi_ref[...].astype(jnp.float32)

    # Point-wise products, computed once (inputs and filters are unfolded
    # identically in the PyTorch module, so the channel-sum is a box-sum of
    # these planes).
    p_r = xr * fr - xi * fi
    # NOTE: reproduces the original PyTorch expression verbatim:
    #   outputs_i = inputs_r*filters_i + inputs_r*filters_i  (== 2 * xr * fi).
    p_i = xr * fi

    def freq_box_sum(c, p):
        if I == 0:
            return p
        # Zero only the two 8-row halo strips (aligned stores, no full-plane
        # zeroing -- safe under megacore since it happens every step), then
        # store the interior at a sublane-aligned offset.
        prow_ref[c, 0:_RH, :] = jnp.zeros((_RH, Tt), jnp.float32)
        prow_ref[c, _RH + D:_RH + D + _RH, :] = jnp.zeros((_RH, Tt), jnp.float32)
        prow_ref[c, _RH:_RH + D, :] = p
        acc = prow_ref[c, _RH - I:_RH - I + D, :]
        for s in range(1, 2 * I + 1):
            acc = acc + prow_ref[c, _RH - I + s:_RH - I + s + D, :]
        return acc

    q = (freq_box_sum(0, p_r), freq_box_sum(1, p_i))

    @pl.when(t == 0)
    def _():
        # Start of a batch: the "tile before the previous tile" is zero padding.
        for c in range(2):
            qcol_ref[c, :, 0:_CH] = jnp.zeros((D, _CH), jnp.float32)

    @pl.when(t > 0)
    def _():
        # The head of the current tile feeds the right time halo of tile t-1;
        # on the final flush step (t == nt) that halo is the conv zero padding.
        head_scale = (t < nt).astype(jnp.float32)
        outs = []
        for c in range(2):
            qcol_ref[c, :, _CH + Tt:_CH + Tt + _CH] = q[c][:, :_CH] * head_scale
            acc = qcol_ref[c, :, _CH - L:_CH - L + Tt]
            for k in range(1, 2 * L + 1):
                acc = acc + qcol_ref[c, :, _CH - L + k:_CH - L + k + Tt]
            outs.append(acc)
        out_ref[0] = outs[0].astype(out_ref.dtype)
        out_ref[1] = (2.0 * outs[1]).astype(out_ref.dtype)
        # Carry: left halo <- last _CH columns of q_{t-1} (current interior),
        # read before the interior is overwritten below.
        for c in range(2):
            qcol_ref[c, :, 0:_CH] = qcol_ref[c, :, Tt:Tt + _CH]

    # Carry: interior <- q_t (used by the emit at step t+1).
    for c in range(2):
        qcol_ref[c, :, _CH:_CH + Tt] = q[c]


def _choose_time_tile(D, T, itemsize):
    """Pick a lane-dense time tile (multiple of 128) whose per-step VMEM
    footprint stays comfortably under the v7x budget, plus the padded length."""
    budget = 40 * 1024 * 1024

    def vmem_estimate(tt):
        plane = D * tt
        return (plane * itemsize * 8            # 4 inputs, double-buffered
                + plane * itemsize * 4          # (2, D, tt) output, double-buffered
                + 2 * (2 * _RH + D) * tt * 4    # row-halo staging scratch
                + 2 * D * (tt + 2 * _CH) * 4    # carried q planes (+ halos)
                + plane * 4 * 8)                # headroom for f32 temporaries

    best_tt = 128
    best_tp = -(-T // 128) * 128
    for tt in (256, 512, 1024):
        tp = -(-T // tt) * tt
        # Accept a bigger tile only if it fits the budget and adds <= 12.5%
        # extra zero padding over the current choice.
        if vmem_estimate(tt) <= budget and (tp - best_tp) * 8 <= best_tp:
            best_tt, best_tp = tt, tp
    return best_tt, best_tp, vmem_estimate(best_tt)


def deep_filter(inputs, filters, *, L, I):
    """inputs / filters: tuples (real, imag), each [B, D, T]. Returns [B, 2D, T]."""
    xr, xi = inputs
    fr, fi = filters
    B, D, T = xr.shape
    if I > _RH or L > _CH:
        raise NotImplementedError("deep_filter kernel supports I <= 8 and L <= 128")

    out_dtype = xr.dtype
    Tt, T_pad, vmem_est = _choose_time_tile(D, T, jnp.dtype(xr.dtype).itemsize)
    nt = T_pad // Tt

    if T_pad != T:
        # Zero padding on the right of the time axis matches the conv2d zero
        # padding; the extra output columns are dropped below.
        pad = ((0, 0), (0, 0), (0, T_pad - T))
        xr = jnp.pad(xr, pad)
        xi = jnp.pad(xi, pad)
        fr = jnp.pad(fr, pad)
        fi = jnp.pad(fi, pad)

    kernel = functools.partial(_deepfilter_kernel, L=L, I=I, D=D, Tt=Tt, nt=nt)

    # One (D, Tt) lane-dense tile per grid step.  The extra flush step (t == nt)
    # re-maps to the last tile, which Pallas does not re-fetch because the block
    # index is unchanged between consecutive steps.
    in_spec = pl.BlockSpec((None, D, Tt),
                           lambda b, t: (b, 0, jnp.minimum(t, nt - 1)))
    # Output tile t-1 is written at step t (one step late), so its right time
    # halo (head of tile t) is available without overlapping input blocks.
    out_spec = pl.BlockSpec((None, 2, D, Tt),
                            lambda b, t: (b, 0, 0, jnp.maximum(t - 1, 0)))

    vmem_limit = int(min(64 * 1024 * 1024,
                         max(32 * 1024 * 1024, vmem_est + 4 * 1024 * 1024)))

    # TODO(synk): when B is smaller than the number of TensorCores (e.g. B=1 on
    # v7x megacore) the sequential time axis leaves a core idle; splitting time
    # into per-core chunks would need a halo re-fetch at the chunk seam.
    out = pl.pallas_call(
        kernel,
        out_shape=jax.ShapeDtypeStruct((B, 2, D, T_pad), out_dtype),
        grid_spec=pltpu.PrefetchScalarGridSpec(
            num_scalar_prefetch=0,
            grid=(B, nt + 1),
            in_specs=[in_spec, in_spec, in_spec, in_spec],
            out_specs=out_spec,
            scratch_shapes=[
                pltpu.VMEM((2, _RH + D + _RH, Tt), jnp.float32),   # row-halo staging
                pltpu.VMEM((2, D, _CH + Tt + _CH), jnp.float32),   # carried q planes
            ],
        ),
        compiler_params=pltpu.CompilerParams(
            dimension_semantics=("parallel", "arbitrary"),
            vmem_limit_bytes=vmem_limit,
        ),
    )(xr, xi, fr, fi)

    # (B, 2, D, T_pad) -> crop time padding -> (B, 2D, T); merging the (2, D)
    # axes is a pure view and matches torch.cat([out_r, out_i], dim=1).
    return out[:, :, :, :T].reshape(B, 2 * D, T)


def deep_filter_ref(inputs, filters, *, L, I):
    """Faithful JAX port of the PyTorch forward (identity conv2d unfold)."""
    xr, xi = inputs
    fr, fi = filters
    t_width = 2 * L + 1
    f_width = 2 * I + 1
    K = t_width * f_width
    eye_kernel = jnp.eye(K, dtype=xr.dtype).reshape(K, 1, f_width, t_width)

    def unfold(x):
        return jax.lax.conv_general_dilated(
            x[:, None], eye_kernel, window_strides=(1, 1),
            padding=((I, I), (L, L)),
            dimension_numbers=("NCHW", "OIHW", "NCHW"))

    ir, ii = unfold(xr), unfold(xi)
    gr, gi = unfold(fr), unfold(fi)
    out_r = jnp.sum(ir * gr - ii * gi, axis=1)
    out_i = jnp.sum(ir * gi + ir * gi, axis=1)
    return jnp.concatenate([out_r, out_i], axis=1)


if __name__ == "__main__":
    L, I = 2, 1            # time / freq context widths (as in the paper)
    B, D, T = 2, 16, 300   # small shapes; exercises time padding (300 -> 384)
                           # and the 3-tile carried time halo

    key = jax.random.PRNGKey(0)
    k1, k2, k3, k4 = jax.random.split(key, 4)
    x_r = jax.random.normal(k1, (B, D, T), jnp.float32)
    x_i = jax.random.normal(k2, (B, D, T), jnp.float32)
    f_r = jax.random.normal(k3, (B, D, T), jnp.float32)
    f_i = jax.random.normal(k4, (B, D, T), jnp.float32)

    out = deep_filter((x_r, x_i), (f_r, f_i), L=L, I=I)
    out = jax.block_until_ready(out)

    ref = deep_filter_ref((x_r, x_i), (f_r, f_i), L=L, I=I)
    assert out.shape == (B, 2 * D, T), out.shape
    assert jnp.allclose(out, ref, atol=1e-4, rtol=1e-4), "mismatch vs reference"

    print("KERNEL_OK")
</pallas_src>

<mosaic_0001>
module attributes {stable_mosaic.version = 11 : i64} {
  func.func @_deepfilter_kernel(%arg0: i32, %arg1: i32, %arg2: memref<1x16x128xf32, #tpu.memory_space<vmem>>, %arg3: memref<1x16x128xf32, #tpu.memory_space<vmem>>, %arg4: memref<1x16x128xf32, #tpu.memory_space<vmem>>, %arg5: memref<1x16x128xf32, #tpu.memory_space<vmem>>, %arg6: memref<1x2x16x128xf32, #tpu.memory_space<vmem>>, %arg7: memref<2x32x128xf32, #tpu.memory_space<vmem>>, %arg8: memref<2x16x384xf32, #tpu.memory_space<vmem>>) attributes {dimension_semantics = [#tpu.dimension_semantics<parallel>, #tpu.dimension_semantics<arbitrary>], iteration_bounds = array<i64: 2, 4>, scalar_prefetch = 0 : i64, scratch_operands = 2 : i64, tpu.core_type = #tpu.core_type<tc>, window_params = [{transform_indices = @transform_0, window_bounds = array<i64: 1, 16, 128>}, {transform_indices = @transform_1, window_bounds = array<i64: 1, 16, 128>}, {transform_indices = @transform_2, window_bounds = array<i64: 1, 16, 128>}, {transform_indices = @transform_3, window_bounds = array<i64: 1, 16, 128>}, {transform_indices = @transform_4, window_bounds = array<i64: 1, 2, 16, 128>}]} {
    %c0 = arith.constant 0 : index
    %c0_0 = arith.constant 0 : index
    %c0_1 = arith.constant 0 : index
    %0 = vector.load %arg2[%c0, %c0_0, %c0_1] : memref<1x16x128xf32, #tpu.memory_space<vmem>>, vector<1x16x128xf32>
    %1 = vector.shape_cast %0 : vector<1x16x128xf32> to vector<16x128xf32>
    %c0_2 = arith.constant 0 : index
    %c0_3 = arith.constant 0 : index
    %c0_4 = arith.constant 0 : index
    %2 = vector.load %arg3[%c0_2, %c0_3, %c0_4] : memref<1x16x128xf32, #tpu.memory_space<vmem>>, vector<1x16x128xf32>
    %3 = vector.shape_cast %2 : vector<1x16x128xf32> to vector<16x128xf32>
    %c0_5 = arith.constant 0 : index
    %c0_6 = arith.constant 0 : index
    %c0_7 = arith.constant 0 : index
    %4 = vector.load %arg4[%c0_5, %c0_6, %c0_7] : memref<1x16x128xf32, #tpu.memory_space<vmem>>, vector<1x16x128xf32>
    %5 = vector.shape_cast %4 : vector<1x16x128xf32> to vector<16x128xf32>
    %c0_8 = arith.constant 0 : index
    %c0_9 = arith.constant 0 : index
    %c0_10 = arith.constant 0 : index
    %6 = vector.load %arg5[%c0_8, %c0_9, %c0_10] : memref<1x16x128xf32, #tpu.memory_space<vmem>>, vector<1x16x128xf32>
    %7 = vector.shape_cast %6 : vector<1x16x128xf32> to vector<16x128xf32>
    %8 = arith.mulf %1, %5 : vector<16x128xf32>
    %9 = arith.mulf %3, %7 : vector<16x128xf32>
    %10 = arith.subf %8, %9 : vector<16x128xf32>
    %11 = arith.mulf %1, %7 : vector<16x128xf32>
    %cst = arith.constant 0.000000e+00 : f32
    %12 = vector.broadcast %cst : f32 to vector<8x128xf32>
    %c0_11 = arith.constant 0 : index
    %c0_12 = arith.constant 0 : index
    %c0_13 = arith.constant 0 : index
    %13 = vector.load %arg7[%c0_11, %c0_12, %c0_13] : memref<2x32x128xf32, #tpu.memory_space<vmem>>, vector<1x8x128xf32>
    %14 = vector.shape_cast %13 : vector<1x8x128xf32> to vector<8x128xf32>
    %15 = vector.shape_cast %12 : vector<8x128xf32> to vector<1x8x128xf32>
    tpu.vector_store %arg7[%c0_11, %c0_12, %c0_13], %15 {strides = array<i32>} : memref<2x32x128xf32, #tpu.memory_space<vmem>>, vector<1x8x128xf32>,
    %cst_14 = arith.constant 0.000000e+00 : f32
    %16 = vector.broadcast %cst_14 : f32 to vector<8x128xf32>
    %c0_15 = arith.constant 0 : index
    %c24 = arith.constant 24 : index
    %c0_16 = arith.constant 0 : index
    %17 = vector.load %arg7[%c0_15, %c24, %c0_16] : memref<2x32x128xf32, #tpu.memory_space<vmem>>, vector<1x8x128xf32>
    %18 = vector.shape_cast %17 : vector<1x8x128xf32> to vector<8x128xf32>
    %19 = vector.shape_cast %16 : vector<8x128xf32> to vector<1x8x128xf32>
    tpu.vector_store %arg7[%c0_15, %c24, %c0_16], %19 {strides = array<i32>} : memref<2x32x128xf32, #tpu.memory_space<vmem>>, vector<1x8x128xf32>,
    %c0_17 = arith.constant 0 : index
    %c8 = arith.constant 8 : index
    %c0_18 = arith.constant 0 : index
    %20 = vector.load %arg7[%c0_17, %c8, %c0_18] : memref<2x32x128xf32, #tpu.memory_space<vmem>>, vector<1x16x128xf32>
    %21 = vector.shape_cast %20 : vector<1x16x128xf32> to vector<16x128xf32>
    %22 = vector.shape_cast %10 : vector<16x128xf32> to vector<1x16x128xf32>
    tpu.vector_store %arg7[%c0_17, %c8, %c0_18], %22 {strides = array<i32>} : memref<2x32x128xf32, #tpu.memory_space<vmem>>, vector<1x16x128xf32>,
    %c0_19 = arith.constant 0 : index
    %c7 = arith.constant 7 : index
    %c0_20 = arith.constant 0 : index
    %23 = vector.load %arg7[%c0_19, %c7, %c0_20] : memref<2x32x128xf32, #tpu.memory_space<vmem>>, vector<1x16x128xf32>
    %24 = vector.shape_cast %23 : vector<1x16x128xf32> to vector<16x128xf32>
    %c0_21 = arith.constant 0 : index
    %c8_22 = arith.constant 8 : index
    %c0_23 = arith.constant 0 : index
    %25 = vector.load %arg7[%c0_21, %c8_22, %c0_23] : memref<2x32x128xf32, #tpu.memory_space<vmem>>, vector<1x16x128xf32>
    %26 = vector.shape_cast %25 : vector<1x16x128xf32> to vector<16x128xf32>
    %27 = arith.addf %24, %26 : vector<16x128xf32>
    %c0_24 = arith.constant 0 : index
    %c9 = arith.constant 9 : index
    %c0_25 = arith.constant 0 : index
    %28 = vector.load %arg7[%c0_24, %c9, %c0_25] : memref<2x32x128xf32, #tpu.memory_space<vmem>>, vector<1x16x128xf32>
    %29 = vector.shape_cast %28 : vector<1x16x128xf32> to vector<16x128xf32>
    %30 = arith.addf %27, %29 : vector<16x128xf32>
    %cst_26 = arith.constant 0.000000e+00 : f32
    %31 = vector.broadcast %cst_26 : f32 to vector<8x128xf32>
    %c1 = arith.constant 1 : index
    %c0_27 = arith.constant 0 : index
    %c0_28 = arith.constant 0 : index
    %32 = vector.load %arg7[%c1, %c0_27, %c0_28] : memref<2x32x128xf32, #tpu.memory_space<vmem>>, vector<1x8x128xf32>
    %33 = vector.shape_cast %32 : vector<1x8x128xf32> to vector<8x128xf32>
    %34 = vector.shape_cast %31 : vector<8x128xf32> to vector<1x8x128xf32>
    tpu.vector_store %arg7[%c1, %c0_27, %c0_28], %34 {strides = array<i32>} : memref<2x32x128xf32, #tpu.memory_space<vmem>>, vector<1x8x128xf32>,
    %cst_29 = arith.constant 0.000000e+00 : f32
    %35 = vector.broadcast %cst_29 : f32 to vector<8x128xf32>
    %c1_30 = arith.constant 1 : index
    %c24_31 = arith.constant 24 : index
    %c0_32 = arith.constant 0 : index
    %36 = vector.load %arg7[%c1_30, %c24_31, %c0_32] : memref<2x32x128xf32, #tpu.memory_space<vmem>>, vector<1x8x128xf32>
    %37 = vector.shape_cast %36 : vector<1x8x128xf32> to vector<8x128xf32>
    %38 = vector.shape_cast %35 : vector<8x128xf32> to vector<1x8x128xf32>
    tpu.vector_store %arg7[%c1_30, %c24_31, %c0_32], %38 {strides = array<i32>} : memref<2x32x128xf32, #tpu.memory_space<vmem>>, vector<1x8x128xf32>,
    %c1_33 = arith.constant 1 : index
    %c8_34 = arith.constant 8 : index
    %c0_35 = arith.constant 0 : index
    %39 = vector.load %arg7[%c1_33, %c8_34, %c0_35] : memref<2x32x128xf32, #tpu.memory_space<vmem>>, vector<1x16x128xf32>
    %40 = vector.shape_cast %39 : vector<1x16x128xf32> to vector<16x128xf32>
    %41 = vector.shape_cast %11 : vector<16x128xf32> to vector<1x16x128xf32>
    tpu.vector_store %arg7[%c1_33, %c8_34, %c0_35], %41 {strides = array<i32>} : memref<2x32x128xf32, #tpu.memory_space<vmem>>, vector<1x16x128xf32>,
    %c1_36 = arith.constant 1 : index
    %c7_37 = arith.constant 7 : index
    %c0_38 = arith.constant 0 : index
    %42 = vector.load %arg7[%c1_36, %c7_37, %c0_38] : memref<2x32x128xf32, #tpu.memory_space<vmem>>, vector<1x16x128xf32>
    %43 = vector.shape_cast %42 : vector<1x16x128xf32> to vector<16x128xf32>
    %c1_39 = arith.constant 1 : index
    %c8_40 = arith.constant 8 : index
    %c0_41 = arith.constant 0 : index
    %44 = vector.load %arg7[%c1_39, %c8_40, %c0_41] : memref<2x32x128xf32, #tpu.memory_space<vmem>>, vector<1x16x128xf32>
    %45 = vector.shape_cast %44 : vector<1x16x128xf32> to vector<16x128xf32>
    %46 = arith.addf %43, %45 : vector<16x128xf32>
    %c1_42 = arith.constant 1 : index
    %c9_43 = arith.constant 9 : index
    %c0_44 = arith.constant 0 : index
    %47 = vector.load %arg7[%c1_42, %c9_43, %c0_44] : memref<2x32x128xf32, #tpu.memory_space<vmem>>, vector<1x16x128xf32>
    %48 = vector.shape_cast %47 : vector<1x16x128xf32> to vector<16x128xf32>
    %49 = arith.addf %46, %48 : vector<16x128xf32>
    %c0_i32 = arith.constant 0 : i32
    %50 = arith.cmpi eq, %arg1, %c0_i32 : i32
    %51 = arith.extui %50 : i1 to i32
    %c0_i32_45 = arith.constant 0 : i32
    %52 = arith.cmpi ne, %51, %c0_i32_45 : i32
    scf.if %52 {
      %cst_53 = arith.constant 0.000000e+00 : f32
      %62 = vector.broadcast %cst_53 : f32 to vector<16x128xf32>
      %c0_54 = arith.constant 0 : index
      %c0_55 = arith.constant 0 : index
      %c0_56 = arith.constant 0 : index
      %63 = vector.load %arg8[%c0_54, %c0_55, %c0_56] : memref<2x16x384xf32, #tpu.memory_space<vmem>>, vector<1x16x128xf32>
      %64 = vector.shape_cast %63 : vector<1x16x128xf32> to vector<16x128xf32>
      %65 = vector.shape_cast %62 : vector<16x128xf32> to vector<1x16x128xf32>
      tpu.vector_store %arg8[%c0_54, %c0_55, %c0_56], %65 {strides = array<i32>} : memref<2x16x384xf32, #tpu.memory_space<vmem>>, vector<1x16x128xf32>,
      %cst_57 = arith.constant 0.000000e+00 : f32
      %66 = vector.broadcast %cst_57 : f32 to vector<16x128xf32>
      %c1_58 = arith.constant 1 : index
      %c0_59 = arith.constant 0 : index
      %c0_60 = arith.constant 0 : index
      %67 = vector.load %arg8[%c1_58, %c0_59, %c0_60] : memref<2x16x384xf32, #tpu.memory_space<vmem>>, vector<1x16x128xf32>
      %68 = vector.shape_cast %67 : vector<1x16x128xf32> to vector<16x128xf32>
      %69 = vector.shape_cast %66 : vector<16x128xf32> to vector<1x16x128xf32>
      tpu.vector_store %arg8[%c1_58, %c0_59, %c0_60], %69 {strides = array<i32>} : memref<2x16x384xf32, #tpu.memory_space<vmem>>, vector<1x16x128xf32>,
    } else {
    }
    %c0_i32_46 = arith.constant 0 : i32
    %53 = arith.cmpi sgt, %arg1, %c0_i32_46 : i32
    %54 = arith.extui %53 : i1 to i32
    %c0_i32_47 = arith.constant 0 : i32
    %55 = arith.cmpi ne, %54, %c0_i32_47 : i32
    scf.if %55 {
      %c3_i32 = arith.constant 3 : i32
      %62 = arith.cmpi slt, %arg1, %c3_i32 : i32
      %63 = arith.extui %62 : i1 to i32
      %64 = arith.sitofp %63 : i32 to f32
      %65 = vector.broadcast %64 : f32 to vector<16x128xf32>
      %66 = arith.mulf %30, %65 : vector<16x128xf32>
      %c0_53 = arith.constant 0 : index
      %c0_54 = arith.constant 0 : index
      %c256 = arith.constant 256 : index
      %67 = vector.load %arg8[%c0_53, %c0_54, %c256] : memref<2x16x384xf32, #tpu.memory_space<vmem>>, vector<1x16x128xf32>
      %68 = vector.shape_cast %67 : vector<1x16x128xf32> to vector<16x128xf32>
      %69 = vector.shape_cast %66 : vector<16x128xf32> to vector<1x16x128xf32>
      tpu.vector_store %arg8[%c0_53, %c0_54, %c256], %69 {strides = array<i32>} : memref<2x16x384xf32, #tpu.memory_space<vmem>>, vector<1x16x128xf32>,
      %c0_55 = arith.constant 0 : index
      %c0_56 = arith.constant 0 : index
      %c126 = arith.constant 126 : index
      %70 = vector.load %arg8[%c0_55, %c0_56, %c126] : memref<2x16x384xf32, #tpu.memory_space<vmem>>, vector<1x16x128xf32>
      %71 = vector.shape_cast %70 : vector<1x16x128xf32> to vector<16x128xf32>
      %c0_57 = arith.constant 0 : index
      %c0_58 = arith.constant 0 : index
      %c127 = arith.constant 127 : index
      %72 = vector.load %arg8[%c0_57, %c0_58, %c127] : memref<2x16x384xf32, #tpu.memory_space<vmem>>, vector<1x16x128xf32>
      %73 = vector.shape_cast %72 : vector<1x16x128xf32> to vector<16x128xf32>
      %74 = arith.addf %71, %73 : vector<16x128xf32>
      %c0_59 = arith.constant 0 : index
      %c0_60 = arith.constant 0 : index
      %c128_61 = arith.constant 128 : index
      %75 = vector.load %arg8[%c0_59, %c0_60, %c128_61] : memref<2x16x384xf32, #tpu.memory_space<vmem>>, vector<1x16x128xf32>
      %76 = vector.shape_cast %75 : vector<1x16x128xf32> to vector<16x128xf32>
      %77 = arith.addf %74, %76 : vector<16x128xf32>
      %c0_62 = arith.constant 0 : index
      %c0_63 = arith.constant 0 : index
      %c129 = arith.constant 129 : index
      %78 = vector.load %arg8[%c0_62, %c0_63, %c129] : memref<2x16x384xf32, #tpu.memory_space<vmem>>, vector<1x16x128xf32>
      %79 = vector.shape_cast %78 : vector<1x16x128xf32> to vector<16x128xf32>
      %80 = arith.addf %77, %79 : vector<16x128xf32>
      %c0_64 = arith.constant 0 : index
      %c0_65 = arith.constant 0 : index
      %c130 = arith.constant 130 : index
      %81 = vector.load %arg8[%c0_64, %c0_65, %c130] : memref<2x16x384xf32, #tpu.memory_space<vmem>>, vector<1x16x128xf32>
      %82 = vector.shape_cast %81 : vector<1x16x128xf32> to vector<16x128xf32>
      %83 = arith.addf %80, %82 : vector<16x128xf32>
      %84 = vector.broadcast %64 : f32 to vector<16x128xf32>
      %85 = arith.mulf %49, %84 : vector<16x128xf32>
      %c1_66 = arith.constant 1 : index
      %c0_67 = arith.constant 0 : index
      %c256_68 = arith.constant 256 : index
      %86 = vector.load %arg8[%c1_66, %c0_67, %c256_68] : memref<2x16x384xf32, #tpu.memory_space<vmem>>, vector<1x16x128xf32>
      %87 = vector.shape_cast %86 : vector<1x16x128xf32> to vector<16x128xf32>
      %88 = vector.shape_cast %85 : vector<16x128xf32> to vector<1x16x128xf32>
      tpu.vector_store %arg8[%c1_66, %c0_67, %c256_68], %88 {strides = array<i32>} : memref<2x16x384xf32, #tpu.memory_space<vmem>>, vector<1x16x128xf32>,
      %c1_69 = arith.constant 1 : index
      %c0_70 = arith.constant 0 : index
      %c126_71 = arith.constant 126 : index
      %89 = vector.load %arg8[%c1_69, %c0_70, %c126_71] : memref<2x16x384xf32, #tpu.memory_space<vmem>>, vector<1x16x128xf32>
      %90 = vector.shape_cast %89 : vector<1x16x128xf32> to vector<16x128xf32>
      %c1_72 = arith.constant 1 : index
      %c0_73 = arith.constant 0 : index
      %c127_74 = arith.constant 127 : index
      %91 = vector.load %arg8[%c1_72, %c0_73, %c127_74] : memref<2x16x384xf32, #tpu.memory_space<vmem>>, vector<1x16x128xf32>
      %92 = vector.shape_cast %91 : vector<1x16x128xf32> to vector<16x128xf32>
      %93 = arith.addf %90, %92 : vector<16x128xf32>
      %c1_75 = arith.constant 1 : index
      %c0_76 = arith.constant 0 : index
      %c128_77 = arith.constant 128 : index
      %94 = vector.load %arg8[%c1_75, %c0_76, %c128_77] : memref<2x16x384xf32, #tpu.memory_space<vmem>>, vector<1x16x128xf32>
      %95 = vector.shape_cast %94 : vector<1x16x128xf32> to vector<16x128xf32>
      %96 = arith.addf %93, %95 : vector<16x128xf32>
      %c1_78 = arith.constant 1 : index
      %c0_79 = arith.constant 0 : index
      %c129_80 = arith.constant 129 : index
      %97 = vector.load %arg8[%c1_78, %c0_79, %c129_80] : memref<2x16x384xf32, #tpu.memory_space<vmem>>, vector<1x16x128xf32>
      %98 = vector.shape_cast %97 : vector<1x16x128xf32> to vector<16x128xf32>
      %99 = arith.addf %96, %98 : vector<16x128xf32>
      %c1_81 = arith.constant 1 : index
      %c0_82 = arith.constant 0 : index
      %c130_83 = arith.constant 130 : index
      %100 = vector.load %arg8[%c1_81, %c0_82, %c130_83] : memref<2x16x384xf32, #tpu.memory_space<vmem>>, vector<1x16x128xf32>
      %101 = vector.shape_cast %100 : vector<1x16x128xf32> to vector<16x128xf32>
      %102 = arith.addf %99, %101 : vector<16x128xf32>
      %c0_84 = arith.constant 0 : index
      %c0_85 = arith.constant 0 : index
      %c0_86 = arith.constant 0 : index
      %c0_87 = arith.constant 0 : index
      %103 = vector.load %arg6[%c0_84, %c0_85, %c0_86, %c0_87] : memref<1x2x16x128xf32, #tpu.memory_space<vmem>>, vector<1x1x16x128xf32>
      %104 = vector.shape_cast %103 : vector<1x1x16x128xf32> to vector<16x128xf32>
      %105 = vector.shape_cast %83 : vector<16x128xf32> to vector<1x1x16x128xf32>
      tpu.vector_store %arg6[%c0_84, %c0_85, %c0_86, %c0_87], %105 {strides = array<i32>} : memref<1x2x16x128xf32, #tpu.memory_space<vmem>>, vector<1x1x16x128xf32>,
      %cst_88 = arith.constant 2.000000e+00 : f32
      %106 = vector.broadcast %cst_88 : f32 to vector<16x128xf32>
      %107 = arith.mulf %106, %102 : vector<16x128xf32>
      %c0_89 = arith.constant 0 : index
      %c1_90 = arith.constant 1 : index
      %c0_91 = arith.constant 0 : index
      %c0_92 = arith.constant 0 : index
      %108 = vector.load %arg6[%c0_89, %c1_90, %c0_91, %c0_92] : memref<1x2x16x128xf32, #tpu.memory_space<vmem>>, vector<1x1x16x128xf32>
      %109 = vector.shape_cast %108 : vector<1x1x16x128xf32> to vector<16x128xf32>
      %110 = vector.shape_cast %107 : vector<16x128xf32> to vector<1x1x16x128xf32>
      tpu.vector_store %arg6[%c0_89, %c1_90, %c0_91, %c0_92], %110 {strides = array<i32>} : memref<1x2x16x128xf32, #tpu.memory_space<vmem>>, vector<1x1x16x128xf32>,
      %c0_93 = arith.constant 0 : index
      %c0_94 = arith.constant 0 : index
      %c128_95 = arith.constant 128 : index
      %111 = vector.load %arg8[%c0_93, %c0_94, %c128_95] : memref<2x16x384xf32, #tpu.memory_space<vmem>>, vector<1x16x128xf32>
      %112 = vector.shape_cast %111 : vector<1x16x128xf32> to vector<16x128xf32>
      %c0_96 = arith.constant 0 : index
      %c0_97 = arith.constant 0 : index
      %c0_98 = arith.constant 0 : index
      %113 = vector.load %arg8[%c0_96, %c0_97, %c0_98] : memref<2x16x384xf32, #tpu.memory_space<vmem>>, vector<1x16x128xf32>
      %114 = vector.shape_cast %113 : vector<1x16x128xf32> to vector<16x128xf32>
      %115 = vector.shape_cast %112 : vector<16x128xf32> to vector<1x16x128xf32>
      tpu.vector_store %arg8[%c0_96, %c0_97, %c0_98], %115 {strides = array<i32>} : memref<2x16x384xf32, #tpu.memory_space<vmem>>, vector<1x16x128xf32>,
      %c1_99 = arith.constant 1 : index
      %c0_100 = arith.constant 0 : index
      %c128_101 = arith.constant 128 : index
      %116 = vector.load %arg8[%c1_99, %c0_100, %c128_101] : memref<2x16x384xf32, #tpu.memory_space<vmem>>, vector<1x16x128xf32>
      %117 = vector.shape_cast %116 : vector<1x16x128xf32> to vector<16x128xf32>
      %c1_102 = arith.constant 1 : index
      %c0_103 = arith.constant 0 : index
      %c0_104 = arith.constant 0 : index
      %118 = vector.load %arg8[%c1_102, %c0_103, %c0_104] : memref<2x16x384xf32, #tpu.memory_space<vmem>>, vector<1x16x128xf32>
      %119 = vector.shape_cast %118 : vector<1x16x128xf32> to vector<16x128xf32>
      %120 = vector.shape_cast %117 : vector<16x128xf32> to vector<1x16x128xf32>
      tpu.vector_store %arg8[%c1_102, %c0_103, %c0_104], %120 {strides = array<i32>} : memref<2x16x384xf32, #tpu.memory_space<vmem>>, vector<1x16x128xf32>,
    } else {
    }
    %c0_48 = arith.constant 0 : index
    %c0_49 = arith.constant 0 : index
    %c128 = arith.constant 128 : index
    %56 = vector.load %arg8[%c0_48, %c0_49, %c128] : memref<2x16x384xf32, #tpu.memory_space<vmem>>, vector<1x16x128xf32>
    %57 = vector.shape_cast %56 : vector<1x16x128xf32> to vector<16x128xf32>
    %58 = vector.shape_cast %30 : vector<16x128xf32> to vector<1x16x128xf32>
    tpu.vector_store %arg8[%c0_48, %c0_49, %c128], %58 {strides = array<i32>} : memref<2x16x384xf32, #tpu.memory_space<vmem>>, vector<1x16x128xf32>,
    %c1_50 = arith.constant 1 : index
    %c0_51 = arith.constant 0 : index
    %c128_52 = arith.constant 128 : index
    %59 = vector.load %arg8[%c1_50, %c0_51, %c128_52] : memref<2x16x384xf32, #tpu.memory_space<vmem>>, vector<1x16x128xf32>
    %60 = vector.shape_cast %59 : vector<1x16x128xf32> to vector<16x128xf32>
    %61 = vector.shape_cast %49 : vector<16x128xf32> to vector<1x16x128xf32>
    tpu.vector_store %arg8[%c1_50, %c0_51, %c128_52], %61 {strides = array<i32>} : memref<2x16x384xf32, #tpu.memory_space<vmem>>, vector<1x16x128xf32>,
    return
  }
  func.func @transform_0(%arg0: i32, %arg1: i32) -> (i32, i32, i32) {
    %c2_i32 = arith.constant 2 : i32
    %0 = arith.minsi %arg1, %c2_i32 : i32
    %c0_i32 = arith.constant 0 : i32
    %c0_i32_0 = arith.constant 0 : i32
    return %arg0, %c0_i32, %0 : i32, i32, i32
  }
  func.func @transform_1(%arg0: i32, %arg1: i32) -> (i32, i32, i32) {
    %c2_i32 = arith.constant 2 : i32
    %0 = arith.minsi %arg1, %c2_i32 : i32
    %c0_i32 = arith.constant 0 : i32
    %c0_i32_0 = arith.constant 0 : i32
    return %arg0, %c0_i32, %0 : i32, i32, i32
  }
  func.func @transform_2(%arg0: i32, %arg1: i32) -> (i32, i32, i32) {
    %c2_i32 = arith.constant 2 : i32
    %0 = arith.minsi %arg1, %c2_i32 : i32
    %c0_i32 = arith.constant 0 : i32
    %c0_i32_0 = arith.constant 0 : i32
    return %arg0, %c0_i32, %0 : i32, i32, i32
  }
  func.func @transform_3(%arg0: i32, %arg1: i32) -> (i32, i32, i32) {
    %c2_i32 = arith.constant 2 : i32
    %0 = arith.minsi %arg1, %c2_i32 : i32
    %c0_i32 = arith.constant 0 : i32
    %c0_i32_0 = arith.constant 0 : i32
    return %arg0, %c0_i32, %0 : i32, i32, i32
  }
  func.func @transform_4(%arg0: i32, %arg1: i32) -> (i32, i32, i32, i32) {
    %c1_i32 = arith.constant 1 : i32
    %0 = arith.subi %arg1, %c1_i32 : i32
    %c0_i32 = arith.constant 0 : i32
    %1 = arith.maxsi %0, %c0_i32 : i32
    %c0_i32_0 = arith.constant 0 : i32
    %c0_i32_1 = arith.constant 0 : i32
    %c0_i32_2 = arith.constant 0 : i32
    return %arg0, %c0_i32_0, %c0_i32_1, %1 : i32, i32, i32, i32
  }
}

</mosaic_0001>

<llo_original>
// kernel: tpu_custom_call.1
$region0: #{tpu_custom_call.1}
  #allocation0 [shape = 'u32[]', space=smem, size = 0x4, offset = 0x4, fixed_abs, tag = 'smem constant byte address 0x4 - core index']
  #allocation1 [shape = 'u32[144,128]{1,0:T(1,128)}', space=vmem, size = 0x12000, scoped, tag = 'internal scratch']
  #allocation2 [shape = 'f32[2,32,128]{2,1,0:T(8,128)}', space=vmem, size = 0x8000, scoped, tag = 'scratch operand']
  #allocation3 [shape = 'f32[2,16,384]{2,1,0:T(8,128)}', space=vmem, size = 0xc000, scoped, tag = 'scratch operand']
  %s0 = inlined_call_operand.hbm [shape: f32[2,16,384], index: 0, kind: input, shape index: {}]
  %s1 = inlined_call_operand.hbm [shape: f32[2,16,384], index: 1, kind: input, shape index: {}]
  %s2 = inlined_call_operand.hbm [shape: f32[2,16,384], index: 2, kind: input, shape index: {}]
  %s3 = inlined_call_operand.hbm [shape: f32[2,16,384], index: 3, kind: input, shape index: {}]
  %s4 = inlined_call_operand.hbm [shape: f32[2,2,16,384], index: 4, kind: output, shape index: {}]
  %s5 = sld [smem:[#allocation0]]
  $region73: #{tpu_custom_call.1} parent=0
    _
  %s7 = ssub.s32 1, %s5
  %s8 = scalar_select 0, %s7, %s5
  $region1: #{tpu_custom_call.1} parent=0
    #allocation4 [shape = 'u8[16384]{0}', space=vmem, size = 0x4000, scoped, tag = 'input window, operand 0']
    #allocation5 [shape = 's32[2]{0}', space=sflag, size = 0x8, scoped, tag = 'scoped memory for tpu_custom_call.1']
    #allocation6 [shape = 's32[2]{0}', space=sflag, size = 0x8, scoped, tag = 'scoped memory for tpu_custom_call.1']
    #allocation7 [shape = 'u8[16384]{0}', space=vmem, size = 0x4000, scoped, tag = 'input window, operand 1']
    #allocation8 [shape = 's32[2]{0}', space=sflag, size = 0x8, scoped, tag = 'scoped memory for tpu_custom_call.1']
    #allocation9 [shape = 'u8[16384]{0}', space=vmem, size = 0x4000, scoped, tag = 'input window, operand 2']
    #allocation10 [shape = 'u8[16384]{0}', space=vmem, size = 0x4000, scoped, tag = 'input window, operand 3']
    #allocation11 [shape = 's32[2]{0}', space=sflag, size = 0x8, scoped, tag = 'scoped memory for tpu_custom_call.1']
    #allocation12 [shape = 'u8[32768]{0}', space=vmem, size = 0x8000, scoped, tag = 'output window, operand 0']
    %9 = vsyncpa [#allocation5], 0
    %s10 = scalar_lea.sflag [#allocation5], 1
    %11 = vsyncpa %s10, 0
    %12 = vsyncpa [#allocation8], 0
    %s13 = scalar_lea.sflag [#allocation8], 1
    %14 = vsyncpa %s13, 0
    %15 = vsyncpa [#allocation11], 0
    %s16 = scalar_lea.sflag [#allocation11], 1
    %17 = vsyncpa %s16, 0
    %18 = vsyncpa [#allocation6], 0
    %s19 = scalar_lea.sflag [#allocation6], 1
    %20 = vsyncpa %s19, 0
    loop: start=0, step=1, limit=10
    $region2: #{tpu_custom_call.1} parent=1 // loop_pre_header
      _
    $region3: #{tpu_custom_call.1} parent=1 // loop_header
      %s22 = sphi 0, %s26
      %p23 = scmp.ge.s32.totalorder %s22, 10
      %s29 = sphi 0, %s41
      %s30 = sphi 0, %s37
      %s31 = sphi 0, %s29
      %s32 = sphi 0, %s30
      %s33 = sphi 0, %s31
      %s34 = sphi 0, %s32
      %s50 = sphi 0, %s52
      %s53 = sphi 0, %s50
      %s54 = sphi 0, %s53
      %s70 = sphi 0, %s54
      %s82 = sphi 0, %s84
      %s85 = sphi 0, %s82
      %s86 = sphi 0, %s85
      %s102 = sphi 0, %s86
      %s114 = sphi 0, %s116
      %s117 = sphi 0, %s114
      %s118 = sphi 0, %s117
      %s134 = sphi 0, %s118
      %s146 = sphi 0, %s148
      %s149 = sphi 0, %s146
      %s150 = sphi 0, %s149
      %s166 = sphi 0, %s150
      %s180 = sphi 0, %s182
      %s183 = sphi 0, %s180
      %s184 = sphi 0, %s183
      %s200 = sphi 0, %s184
    $region4: #{tpu_custom_call.1} parent=1 // loop_header_branch
      %25 = sbr.rel (%p23) target = $region8
    $region5: #{tpu_custom_call.1} parent=1 // loop_body
      %s27 = ssub.s32 %s22, 1
      %s28 = ssub.s32 %s22, 2
      %s35 = sadd.s32 1, %s30
      %p36 = scmp.ge.s32.totalorder %s35, 4
      %s37 = scalar_select %p36, 0, %s35
      %s38 = sadd.s32 1, %s29
      %s39 = scalar_select %p36, %s38, %s29
      %p40 = scmp.ge.s32.totalorder %s39, 2
      %s41 = scalar_select %p40, 0, %s39
      %p42 = scmp.lt.s32.totalorder %s30, 2
      %s43 = scalar_select %p42, %s30, 2
      %p44 = scmp.lt.s32.totalorder %s37, 2
      %s45 = scalar_select %p44, %s37, 2
      %s46 = ssub.s32 %s29, %s41
      %s47 = ssub.s32 %s43, %s45
      %s48 = sor.u32 %s46, %s47
      %p49 = scmp.eq.s32.totalorder %s48, 0
      %s51 = sadd.s32 %s50, 1
      %s52 = scalar_select %p49, %s50, %s51
      %p55 = pneg %p49
      %p56 = scmp.eq.s32.totalorder %s22, 7
      %p57 = por %p55, %p56
      %p58 = scmp.ne.s32.totalorder %s50, %s53
      %p59 = scmp.eq.s32.totalorder %s22, 0
      %p60 = por %p58, %p59
      %p61 = scmp.ne.s32.totalorder %s50, %s53
      %p62 = scmp.eq.s32.totalorder %s27, 7
      %p63 = por %p61, %p62
      %p64 = scmp.ne.s32.totalorder %s53, %s54
      %p65 = scmp.eq.s32.totalorder %s27, 0
      %p66 = por %p64, %p65
      %p67 = scmp.ne.s32.totalorder %s53, %s54
      %p68 = scmp.eq.s32.totalorder %s28, 7
      %p69 = por %p67, %p68
      %p71 = scmp.ne.s32.totalorder %s54, %s70
      %p72 = scmp.eq.s32.totalorder %s28, 0
      %p73 = por %p71, %p72
      %p74 = scmp.lt.s32.totalorder %s30, 2
      %s75 = scalar_select %p74, %s30, 2
      %p76 = scmp.lt.s32.totalorder %s37, 2
      %s77 = scalar_select %p76, %s37, 2
      %s78 = ssub.s32 %s29, %s41
      %s79 = ssub.s32 %s75, %s77
      %s80 = sor.u32 %s78, %s79
      %p81 = scmp.eq.s32.totalorder %s80, 0
      %s83 = sadd.s32 %s82, 1
      %s84 = scalar_select %p81, %s82, %s83
      %p87 = pneg %p81
      %p88 = scmp.eq.s32.totalorder %s22, 7
      %p89 = por %p87, %p88
      %p90 = scmp.ne.s32.totalorder %s82, %s85
      %p91 = scmp.eq.s32.totalorder %s22, 0
      %p92 = por %p90, %p91
      %p93 = scmp.ne.s32.totalorder %s82, %s85
      %p94 = scmp.eq.s32.totalorder %s27, 7
      %p95 = por %p93, %p94
      %p96 = scmp.ne.s32.totalorder %s85, %s86
      %p97 = scmp.eq.s32.totalorder %s27, 0
      %p98 = por %p96, %p97
      %p99 = scmp.ne.s32.totalorder %s85, %s86
      %p100 = scmp.eq.s32.totalorder %s28, 7
      %p101 = por %p99, %p100
      %p103 = scmp.ne.s32.totalorder %s86, %s102
      %p104 = scmp.eq.s32.totalorder %s28, 0
      %p105 = por %p103, %p104
      %p106 = scmp.lt.s32.totalorder %s30, 2
      %s107 = scalar_select %p106, %s30, 2
      %p108 = scmp.lt.s32.totalorder %s37, 2
      %s109 = scalar_select %p108, %s37, 2
      %s110 = ssub.s32 %s29, %s41
      %s111 = ssub.s32 %s107, %s109
      %s112 = sor.u32 %s110, %s111
      %p113 = scmp.eq.s32.totalorder %s112, 0
      %s115 = sadd.s32 %s114, 1
      %s116 = scalar_select %p113, %s114, %s115
      %p119 = pneg %p113
      %p120 = scmp.eq.s32.totalorder %s22, 7
      %p121 = por %p119, %p120
      %p122 = scmp.ne.s32.totalorder %s114, %s117
      %p123 = scmp.eq.s32.totalorder %s22, 0
      %p124 = por %p122, %p123
      %p125 = scmp.ne.s32.totalorder %s114, %s117
      %p126 = scmp.eq.s32.totalorder %s27, 7
      %p127 = por %p125, %p126
      %p128 = scmp.ne.s32.totalorder %s117, %s118
      %p129 = scmp.eq.s32.totalorder %s27, 0
      %p130 = por %p128, %p129
      %p131 = scmp.ne.s32.totalorder %s117, %s118
      %p132 = scmp.eq.s32.totalorder %s28, 7
      %p133 = por %p131, %p132
      %p135 = scmp.ne.s32.totalorder %s118, %s134
      %p136 = scmp.eq.s32.totalorder %s28, 0
      %p137 = por %p135, %p136
      %p138 = scmp.lt.s32.totalorder %s30, 2
      %s139 = scalar_select %p138, %s30, 2
      %p140 = scmp.lt.s32.totalorder %s37, 2
      %s141 = scalar_select %p140, %s37, 2
      %s142 = ssub.s32 %s29, %s41
      %s143 = ssub.s32 %s139, %s141
      %s144 = sor.u32 %s142, %s143
      %p145 = scmp.eq.s32.totalorder %s144, 0
      %s147 = sadd.s32 %s146, 1
      %s148 = scalar_select %p145, %s146, %s147
      %p151 = pneg %p145
      %p152 = scmp.eq.s32.totalorder %s22, 7
      %p153 = por %p151, %p152
      %p154 = scmp.ne.s32.totalorder %s146, %s149
      %p155 = scmp.eq.s32.totalorder %s22, 0
      %p156 = por %p154, %p155
      %p157 = scmp.ne.s32.totalorder %s146, %s149
      %p158 = scmp.eq.s32.totalorder %s27, 7
      %p159 = por %p157, %p158
      %p160 = scmp.ne.s32.totalorder %s149, %s150
      %p161 = scmp.eq.s32.totalorder %s27, 0
      %p162 = por %p160, %p161
      %p163 = scmp.ne.s32.totalorder %s149, %s150
      %p164 = scmp.eq.s32.totalorder %s28, 7
      %p165 = por %p163, %p164
      %p167 = scmp.ne.s32.totalorder %s150, %s166
      %p168 = scmp.eq.s32.totalorder %s28, 0
      %p169 = por %p167, %p168
      %s170 = ssub.s32 %s30, 1
      %p171 = scmp.gt.s32.totalorder %s170, 0
      %s172 = scalar_select %p171, %s170, 0
      %s173 = ssub.s32 %s37, 1
      %p174 = scmp.gt.s32.totalorder %s173, 0
      %s175 = scalar_select %p174, %s173, 0
      %s176 = ssub.s32 %s29, %s41
      %s177 = ssub.s32 %s172, %s175
      %s178 = sor.u32 %s176, %s177
      %p179 = scmp.eq.s32.totalorder %s178, 0
      %s181 = sadd.s32 %s180, 1
      %s182 = scalar_select %p179, %s180, %s181
      %p185 = pneg %p179
      %p186 = scmp.eq.s32.totalorder %s22, 7
      %p187 = por %p185, %p186
      %p188 = scmp.ne.s32.totalorder %s180, %s183
      %p189 = scmp.eq.s32.totalorder %s22, 0
      %p190 = por %p188, %p189
      %p191 = scmp.ne.s32.totalorder %s180, %s183
      %p192 = scmp.eq.s32.totalorder %s27, 7
      %p193 = por %p191, %p192
      %p194 = scmp.ne.s32.totalorder %s183, %s184
      %p195 = scmp.eq.s32.totalorder %s27, 0
      %p196 = por %p194, %p195
      %p197 = scmp.ne.s32.totalorder %s183, %s184
      %p198 = scmp.eq.s32.totalorder %s28, 7
      %p199 = por %p197, %p198
      %p201 = scmp.ne.s32.totalorder %s184, %s200
      %p202 = scmp.eq.s32.totalorder %s28, 0
      %p203 = por %p201, %p202
      %p204 = scmp.le.s32.totalorder 1, %s22
      %p205 = scmp.lt.s32.totalorder %s22, 9
      %p206 = pnand %p204, %p205
      %p207 = pneg %p206
      // Predicated region
      $region9: #{tpu_custom_call.1} parent=5 // pred_check
        _
      $region10: #{tpu_custom_call.1} parent=5 // pred_check_branch
        %209 = sbr.rel (%p206) target = $region12
      $region11: #{tpu_custom_call.1} parent=5 // pred_region
        %s210 = ssub.s32 %s22, 1
      $region12: #{tpu_custom_call.1} parent=5 // pred_fallthru
        _
      %p211 = scmp.lt.s32.totalorder %s22, 8
      // Predicated region
      $region13: #{tpu_custom_call.1} parent=5 // pred_check
        %p212 = pneg %p211
      $region14: #{tpu_custom_call.1} parent=5 // pred_check_branch
        %214 = sbr.rel (%p212) target = $region16
      $region15: #{tpu_custom_call.1} parent=5 // pred_region
        // Predicated region
        $region17: #{tpu_custom_call.1} parent=15 // pred_check
          %p215 = pneg %p60
        $region18: #{tpu_custom_call.1} parent=15 // pred_check_branch
          %217 = sbr.rel (%p215) target = $region20
        $region19: #{tpu_custom_call.1} parent=15 // pred_region
          %s218 = sand.u32 %s50, 1
          %s219 = scalar_lea.sflag [#allocation5], %s218
          %s220 = sand.u32 %s50, 1
          %s221 = smul.addr %s220, 16
          %s222 = scalar_lea.vmem [#allocation4], %s221
          %p223 = scmp.lt.s32.totalorder %s30, 2
          %s224 = scalar_select %p223, %s30, 2
          %s226 = ssub.s32 256, 256
          %227 = vsyncadd %s219, %s226
          %s228 = smul.addr %s29, 6
          %s229 = sadd.s32 %s224, %s228
          %s230 = smul.addr %s229, 128
          %s231 = scalar_lea.hbm %s0, %s230
          %s232 = sshll.u32 %s222, 4
          %s233 = int_to_ptr.vmem [resolvable:$true] %s232
          %238 = dma.hbm_to_vmem [thread:$0]  %s231, 256, %s233, %s219, 384, 128, 8
        $region20: #{tpu_custom_call.1} parent=15 // pred_fallthru
          _
        // Predicated region
        $region21: #{tpu_custom_call.1} parent=15 // pred_check
          %p239 = pneg %p92
        $region22: #{tpu_custom_call.1} parent=15 // pred_check_branch
          %241 = sbr.rel (%p239) target = $region24
        $region23: #{tpu_custom_call.1} parent=15 // pred_region
          %s242 = sand.u32 %s22, 1
          %s243 = scalar_lea.sflag [#allocation8], %s242
          %s244 = sand.u32 %s82, 1
          %s245 = smul.addr %s244, 16
          %s246 = scalar_lea.vmem [#allocation7], %s245
          %p247 = scmp.lt.s32.totalorder %s30, 2
          %s248 = scalar_select %p247, %s30, 2
          %s250 = ssub.s32 256, 256
          %251 = vsyncadd %s243, %s250
          %s252 = smul.addr %s29, 6
          %s253 = sadd.s32 %s248, %s252
          %s254 = smul.addr %s253, 128
          %s255 = scalar_lea.hbm %s1, %s254
          %s256 = sshll.u32 %s246, 4
          %s257 = int_to_ptr.vmem [resolvable:$true] %s256
          %262 = dma.hbm_to_vmem [thread:$0]  %s255, 256, %s257, %s243, 384, 128, 8
        $region24: #{tpu_custom_call.1} parent=15 // pred_fallthru
          _
        // Predicated region
        $region25: #{tpu_custom_call.1} parent=15 // pred_check
          %p263 = pneg %p124
        $region26: #{tpu_custom_call.1} parent=15 // pred_check_branch
          %265 = sbr.rel (%p263) target = $region28
        $region27: #{tpu_custom_call.1} parent=15 // pred_region
          %s266 = sand.u32 %s22, 1
          %s267 = scalar_lea.sflag [#allocation8], %s266
          %s268 = sand.u32 %s114, 1
          %s269 = smul.addr %s268, 16
          %s270 = scalar_lea.vmem [#allocation9], %s269
          %p271 = scmp.lt.s32.totalorder %s30, 2
          %s272 = scalar_select %p271, %s30, 2
          %s274 = ssub.s32 256, 256
          %275 = vsyncadd %s267, %s274
          %s276 = smul.addr %s29, 6
          %s277 = sadd.s32 %s272, %s276
          %s278 = smul.addr %s277, 128
          %s279 = scalar_lea.hbm %s2, %s278
          %s280 = sshll.u32 %s270, 4
          %s281 = int_to_ptr.vmem [resolvable:$true] %s280
          %286 = dma.hbm_to_vmem [thread:$0]  %s279, 256, %s281, %s267, 384, 128, 8
        $region28: #{tpu_custom_call.1} parent=15 // pred_fallthru
          _
        // Predicated region
        $region29: #{tpu_custom_call.1} parent=15 // pred_check
          %p287 = pneg %p156
        $region30: #{tpu_custom_call.1} parent=15 // pred_check_branch
          %289 = sbr.rel (%p287) target = $region32
        $region31: #{tpu_custom_call.1} parent=15 // pred_region
          %s290 = sand.u32 %s146, 1
          %s291 = scalar_lea.sflag [#allocation11], %s290
          %s292 = sand.u32 %s146, 1
          %s293 = smul.addr %s292, 16
          %s294 = scalar_lea.vmem [#allocation10], %s293
          %p295 = scmp.lt.s32.totalorder %s30, 2
          %s296 = scalar_select %p295, %s30, 2
          %s298 = ssub.s32 256, 256
          %299 = vsyncadd %s291, %s298
          %s300 = smul.addr %s29, 6
          %s301 = sadd.s32 %s296, %s300
          %s302 = smul.addr %s301, 128
          %s303 = scalar_lea.hbm %s3, %s302
          %s304 = sshll.u32 %s294, 4
          %s305 = int_to_ptr.vmem [resolvable:$true] %s304
          %310 = dma.hbm_to_vmem [thread:$0]  %s303, 256, %s305, %s291, 384, 128, 8
        $region32: #{tpu_custom_call.1} parent=15 // pred_fallthru
          _
      $region16: #{tpu_custom_call.1} parent=5 // pred_fallthru
        _
      %p311 = scmp.le.s32.totalorder 1, %s22
      %p312 = scmp.lt.s32.totalorder %s22, 9
      %p313 = pnand %p311, %p312
      %p314 = pneg %p313
      // Predicated region
      $region33: #{tpu_custom_call.1} parent=5 // pred_check
        _
      $region34: #{tpu_custom_call.1} parent=5 // pred_check_branch
        %316 = sbr.rel (%p313) target = $region36
      $region35: #{tpu_custom_call.1} parent=5 // pred_region
        %s317 = ssub.s32 %s22, 1
        %s318 = sand.u32 %s53, 1
        %s319 = scalar_lea.sflag [#allocation5], %s318
        %s320 = sand.u32 %s53, 1
        %s321 = smul.addr %s320, 16
        %s322 = scalar_lea.vmem [#allocation4], %s321
        // Predicated region
        $region37: #{tpu_custom_call.1} parent=35 // pred_check
          %p323 = pneg %p66
        $region38: #{tpu_custom_call.1} parent=35 // pred_check_branch
          %325 = sbr.rel (%p323) target = $region40
        $region39: #{tpu_custom_call.1} parent=35 // pred_region
          %326 = dma.done %s319, 256
        $region40: #{tpu_custom_call.1} parent=35 // pred_fallthru
          _
        %s327 = sand.u32 %s27, 1
        %s328 = scalar_lea.sflag [#allocation8], %s327
        %s329 = sand.u32 %s85, 1
        %s330 = smul.addr %s329, 16
        %s331 = scalar_lea.vmem [#allocation7], %s330
        // Predicated region
        $region41: #{tpu_custom_call.1} parent=35 // pred_check
          %p332 = pneg %p98
        $region42: #{tpu_custom_call.1} parent=35 // pred_check_branch
          %334 = sbr.rel (%p332) target = $region44
        $region43: #{tpu_custom_call.1} parent=35 // pred_region
          %335 = dma.done %s328, 256
        $region44: #{tpu_custom_call.1} parent=35 // pred_fallthru
          _
        %s336 = sand.u32 %s27, 1
        %s337 = scalar_lea.sflag [#allocation8], %s336
        %s338 = sand.u32 %s117, 1
        %s339 = smul.addr %s338, 16
        %s340 = scalar_lea.vmem [#allocation9], %s339
        // Predicated region
        $region45: #{tpu_custom_call.1} parent=35 // pred_check
          %p341 = pneg %p130
        $region46: #{tpu_custom_call.1} parent=35 // pred_check_branch
          %343 = sbr.rel (%p341) target = $region48
        $region47: #{tpu_custom_call.1} parent=35 // pred_region
          %344 = dma.done %s337, 256
        $region48: #{tpu_custom_call.1} parent=35 // pred_fallthru
          _
        %s345 = sand.u32 %s149, 1
        %s346 = scalar_lea.sflag [#allocation11], %s345
        %s347 = sand.u32 %s149, 1
        %s348 = smul.addr %s347, 16
        %s349 = scalar_lea.vmem [#allocation10], %s348
        // Predicated region
        $region49: #{tpu_custom_call.1} parent=35 // pred_check
          %p350 = pneg %p162
        $region50: #{tpu_custom_call.1} parent=35 // pred_check_branch
          %352 = sbr.rel (%p350) target = $region52
        $region51: #{tpu_custom_call.1} parent=35 // pred_region
          %353 = dma.done %s346, 256
        $region52: #{tpu_custom_call.1} parent=35 // pred_fallthru
          _
        %s354 = sand.u32 %s53, 1
        %s355 = scalar_lea.sflag [#allocation5], %s354
        %s356 = sand.u32 %s53, 1
        %s357 = smul.addr %s356, 16
        %s358 = scalar_lea.vmem [#allocation4], %s357
        %p359 = pneg %p66
        %p360 = pneg %p63
        %s361 = sand.u32 %s27, 1
        %s362 = scalar_lea.sflag [#allocation8], %s361
        %s363 = sand.u32 %s85, 1
        %s364 = smul.addr %s363, 16
        %s365 = scalar_lea.vmem [#allocation7], %s364
        %p366 = pneg %p98
        %p367 = pneg %p95
        %s368 = sand.u32 %s27, 1
        %s369 = scalar_lea.sflag [#allocation8], %s368
        %s370 = sand.u32 %s117, 1
        %s371 = smul.addr %s370, 16
        %s372 = scalar_lea.vmem [#allocation9], %s371
        %p373 = pneg %p130
        %p374 = pneg %p127
        %s375 = sand.u32 %s149, 1
        %s376 = scalar_lea.sflag [#allocation11], %s375
        %s377 = sand.u32 %s149, 1
        %s378 = smul.addr %s377, 16
        %s379 = scalar_lea.vmem [#allocation10], %s378
        %p380 = pneg %p162
        %p381 = pneg %p159
        %p382 = pneg %p196
        %p383 = pneg %p193
        %s384 = sand.u32 %s183, 1
        %s385 = scalar_lea.sflag [#allocation6], %s384
        %s386 = sand.u32 %s183, 1
        %s387 = smul.addr %s386, 32
        %s388 = scalar_lea.vmem [#allocation12], %s387
        %p389 = scmp.lt.s32.totalorder %s32, 2
        %s390 = scalar_select %p389, %s32, 2
        %p391 = scmp.lt.s32.totalorder %s32, 2
        %s392 = scalar_select %p391, %s32, 2
        %p393 = scmp.lt.s32.totalorder %s32, 2
        %s394 = scalar_select %p393, %s32, 2
        %p395 = scmp.lt.s32.totalorder %s32, 2
        %s396 = scalar_select %p395, %s32, 2
        %s397 = ssub.s32 %s32, 1
        %p398 = scmp.gt.s32.totalorder %s397, 0
        %s399 = scalar_select %p398, %s397, 0
        %v400 = vld [vmem:[%s322] sm:$0xff]
        %v401 = vld [vmem:[%s322 + $0x8] sm:$0xff]
        %v402 = vld [vmem:[%s331] sm:$0xff]
        %v403 = vld [vmem:[%s331 + $0x8] sm:$0xff]
        %v404 = vld [vmem:[%s340] sm:$0xff]
        %v405 = vld [vmem:[%s340 + $0x8] sm:$0xff]
        %v406 = vld [vmem:[%s349] sm:$0xff]
        %v407 = vld [vmem:[%s349 + $0x8] sm:$0xff]
        %v408 = vmul.f32 %v400, %v404
        %v409 = vmul.f32 %v401, %v405
        %v410 = vmul.f32 %v402, %v406
        %v411 = vmul.f32 %v403, %v407
        %v412 = vsub.f32 %v408, %v410
        %v413 = vsub.f32 %v409, %v411
        %v414 = vmul.f32 %v400, %v406
        %v415 = vmul.f32 %v401, %v407
        %416 = vst [vmem:[#allocation2] sm:$0xff] 0.0
        %417 = vst [vmem:[#allocation2 + $0x18] sm:$0xff] 0.0
        %418 = vst [vmem:[#allocation2 + $0x8] sm:$0xff] %v412
        %419 = vst [vmem:[#allocation2 + $0x10] sm:$0xff] %v413
        %v420 = vld [vmem:[#allocation2 + $0x7] sm:$0xff]
        %v421 = vld [vmem:[#allocation2 + $0xf] sm:$0xff]
        %v422 = vld [vmem:[#allocation2 + $0x8] sm:$0xff]
        %v423 = vld [vmem:[#allocation2 + $0x10] sm:$0xff]
        %v424 = vadd.f32 %v420, %v422
        %v425 = vadd.f32 %v421, %v423
        %v426 = vld [vmem:[#allocation2 + $0x9] sm:$0xff]
        %v427 = vld [vmem:[#allocation2 + $0x11] sm:$0xff]
        %v428 = vadd.f32 %v424, %v426
        %v429 = vadd.f32 %v425, %v427
        %s430 = scalar_lea.vmem [#allocation2], 32
        %431 = vst [vmem:[%s430] sm:$0xff] 0.0
        %432 = vst [vmem:[%s430 + $0x18] sm:$0xff] 0.0
        %433 = vst [vmem:[%s430 + $0x8] sm:$0xff] %v414
        %434 = vst [vmem:[%s430 + $0x10] sm:$0xff] %v415
        %v435 = vld [vmem:[%s430 + $0x7] sm:$0xff]
        %v436 = vld [vmem:[%s430 + $0xf] sm:$0xff]
        %v437 = vld [vmem:[%s430 + $0x8] sm:$0xff]
        %v438 = vld [vmem:[%s430 + $0x10] sm:$0xff]
        %v439 = vadd.f32 %v435, %v437
        %v440 = vadd.f32 %v436, %v438
        %v441 = vld [vmem:[%s430 + $0x9] sm:$0xff]
        %v442 = vld [vmem:[%s430 + $0x11] sm:$0xff]
        %v443 = vadd.f32 %v439, %v441
        %v444 = vadd.f32 %v440, %v442
        %p445 = scmp.eq.s32.totalorder %s32, 0
        // Predicated region
        $region53: #{tpu_custom_call.1} parent=35 // pred_check
          %p446 = pneg %p445
        $region54: #{tpu_custom_call.1} parent=35 // pred_check_branch
          %448 = sbr.rel (%p446) target = $region56
        $region55: #{tpu_custom_call.1} parent=35 // pred_region
          %449 = vst [vmem:[#allocation3] sm:$0xff] 0.0
          %450 = vst [vmem:[#allocation3 + $0x18] sm:$0xff] 0.0
          %s451 = scalar_lea.vmem [#allocation3], 48
          %452 = vst [vmem:[%s451] sm:$0xff] 0.0
          %453 = vst [vmem:[%s451 + $0x18] sm:$0xff] 0.0
        $region56: #{tpu_custom_call.1} parent=35 // pred_fallthru
          _
        %p454 = scmp.gt.s32.totalorder %s32, 0
        // Predicated region
        $region57: #{tpu_custom_call.1} parent=35 // pred_check
          %p455 = pneg %p454
        $region58: #{tpu_custom_call.1} parent=35 // pred_check_branch
          %457 = sbr.rel (%p455) target = $region60
        $region59: #{tpu_custom_call.1} parent=35 // pred_region
          %p458 = scmp.lt.s32.totalorder %s32, 3
          %s459 = scalar_select %p458, 1, 0
          %s460 = scvt.s32.f32 %s459
          %v461 = vstv %s460
          %v462 = vmul.f32 %v428, %v461
          %v463 = vmul.f32 %v429, %v461
          %464 = vst [vmem:[#allocation3 + $0x10] sm:$0xff] %v462
          %465 = vst [vmem:[#allocation3 + $0x28] sm:$0xff] %v463
          %v466 = vld [vmem:[#allocation3] sm:$0xff]
          %v467 = vld [vmem:[#allocation3 + $0x8] sm:$0xff]
          %v468 = vld [vmem:[#allocation3 + $0x18] sm:$0xff]
          %v469 = vld [vmem:[#allocation3 + $0x20] sm:$0xff]
          %474 = vrot.lane.b32.xlu0 %v466, 127
          %v475 = vpop.permute.xlu0 %474
          %476 = vrot.lane.b32.xlu0 %v467, 127
          %v477 = vpop.permute.xlu0 %476
          %478 = vrot.lane.b32.xlu0 %v468, 127
          %v479 = vpop.permute.xlu0 %478
          %480 = vrot.lane.b32.xlu0 %v469, 127
          %v481 = vpop.permute.xlu0 %480
          %vm482 = vcmask 1039360
          %v483 = vsel %vm482, %v475, %v477
          %v484 = vsel %vm482, %v479, %v481
          %v489 = vadd.f32 %v466, %v483
          %v490 = vadd.f32 %v467, %v477
          %v491 = vadd.f32 %v468, %v484
          %v492 = vadd.f32 %v469, %v481
          %493 = vrot.lane.b32.xlu0 %v467, 126
          %v494 = vpop.permute.xlu0 %493
          %495 = vrot.lane.b32.xlu0 %v469, 126
          %v496 = vpop.permute.xlu0 %495
          %v499 = vadd.f32 %v489, %v494
          %v500 = vadd.f32 %v490, %v494
          %v501 = vadd.f32 %v491, %v496
          %v502 = vadd.f32 %v492, %v496
          %v503 = vld [vmem:[#allocation3 + $0x10] sm:$0xff]
          %v504 = vld [vmem:[#allocation3 + $0x28] sm:$0xff]
          %507 = vrot.lane.b32.xlu0 %v467, 125
          %v508 = vpop.permute.xlu0 %507
          %509 = vrot.lane.b32.xlu0 %v503, 125
          %v510 = vpop.permute.xlu0 %509
          %511 = vrot.lane.b32.xlu0 %v469, 125
          %v512 = vpop.permute.xlu0 %511
          %513 = vrot.lane.b32.xlu0 %v504, 125
          %v514 = vpop.permute.xlu0 %513
          %vm515 = vcmask 1022976
          %v516 = vsel %vm515, %v508, %v510
          %v517 = vsel %vm515, %v512, %v514
          %v522 = vadd.f32 %v499, %v508
          %v523 = vadd.f32 %v500, %v516
          %v524 = vadd.f32 %v501, %v512
          %v525 = vadd.f32 %v502, %v517
          %526 = vrot.lane.b32.xlu0 %v467, 124
          %v527 = vpop.permute.xlu0 %526
          %528 = vrot.lane.b32.xlu0 %v503, 124
          %v529 = vpop.permute.xlu0 %528
          %530 = vrot.lane.b32.xlu0 %v469, 124
          %v531 = vpop.permute.xlu0 %530
          %532 = vrot.lane.b32.xlu0 %v504, 124
          %v533 = vpop.permute.xlu0 %532
          %vm534 = vcmask 1014784
          %v535 = vsel %vm534, %v527, %v529
          %v536 = vsel %vm534, %v531, %v533
          %v541 = vadd.f32 %v522, %v527
          %v542 = vadd.f32 %v523, %v535
          %v543 = vadd.f32 %v524, %v531
          %v544 = vadd.f32 %v525, %v536
          %v545 = vmul.f32 %v443, %v461
          %v546 = vmul.f32 %v444, %v461
          %s547 = scalar_lea.vmem [#allocation3], 48
          %548 = vst [vmem:[%s547 + $0x10] sm:$0xff] %v545
          %549 = vst [vmem:[%s547 + $0x28] sm:$0xff] %v546
          %v550 = vld [vmem:[%s547] sm:$0xff]
          %v551 = vld [vmem:[%s547 + $0x8] sm:$0xff]
          %v552 = vld [vmem:[%s547 + $0x18] sm:$0xff]
          %v553 = vld [vmem:[%s547 + $0x20] sm:$0xff]
          %558 = vrot.lane.b32.xlu0 %v550, 127
          %v559 = vpop.permute.xlu0 %558
          %560 = vrot.lane.b32.xlu0 %v551, 127
          %v561 = vpop.permute.xlu0 %560
          %562 = vrot.lane.b32.xlu0 %v552, 127
          %v563 = vpop.permute.xlu0 %562
          %564 = vrot.lane.b32.xlu0 %v553, 127
          %v565 = vpop.permute.xlu0 %564
          %v566 = vsel %vm482, %v559, %v561
          %v567 = vsel %vm482, %v563, %v565
          %v572 = vadd.f32 %v550, %v566
          %v573 = vadd.f32 %v551, %v561
          %v574 = vadd.f32 %v552, %v567
          %v575 = vadd.f32 %v553, %v565
          %576 = vrot.lane.b32.xlu0 %v551, 126
          %v577 = vpop.permute.xlu0 %576
          %578 = vrot.lane.b32.xlu0 %v553, 126
          %v579 = vpop.permute.xlu0 %578
          %v582 = vadd.f32 %v572, %v577
          %v583 = vadd.f32 %v573, %v577
          %v584 = vadd.f32 %v574, %v579
          %v585 = vadd.f32 %v575, %v579
          %v586 = vld [vmem:[%s547 + $0x10] sm:$0xff]
          %v587 = vld [vmem:[%s547 + $0x28] sm:$0xff]
          %590 = vrot.lane.b32.xlu0 %v551, 125
          %v591 = vpop.permute.xlu0 %590
          %592 = vrot.lane.b32.xlu0 %v586, 125
          %v593 = vpop.permute.xlu0 %592
          %594 = vrot.lane.b32.xlu0 %v553, 125
          %v595 = vpop.permute.xlu0 %594
          %596 = vrot.lane.b32.xlu0 %v587, 125
          %v597 = vpop.permute.xlu0 %596
          %v598 = vsel %vm515, %v591, %v593
          %v599 = vsel %vm515, %v595, %v597
          %v604 = vadd.f32 %v582, %v591
          %v605 = vadd.f32 %v583, %v598
          %v606 = vadd.f32 %v584, %v595
          %v607 = vadd.f32 %v585, %v599
          %608 = vrot.lane.b32.xlu0 %v551, 124
          %v609 = vpop.permute.xlu0 %608
          %610 = vrot.lane.b32.xlu0 %v586, 124
          %v611 = vpop.permute.xlu0 %610
          %612 = vrot.lane.b32.xlu0 %v553, 124
          %v613 = vpop.permute.xlu0 %612
          %614 = vrot.lane.b32.xlu0 %v587, 124
          %v615 = vpop.permute.xlu0 %614
          %v616 = vsel %vm534, %v609, %v611
          %v617 = vsel %vm534, %v613, %v615
          %v622 = vadd.f32 %v604, %v609
          %v623 = vadd.f32 %v605, %v616
          %v624 = vadd.f32 %v606, %v613
          %v625 = vadd.f32 %v607, %v617
          %630 = vrot.lane.b32.xlu0 %v541, 2
          %v631 = vpop.permute.xlu0 %630
          %632 = vrot.lane.b32.xlu0 %v542, 2
          %v633 = vpop.permute.xlu0 %632
          %634 = vrot.lane.b32.xlu0 %v543, 2
          %v635 = vpop.permute.xlu0 %634
          %636 = vrot.lane.b32.xlu0 %v544, 2
          %v637 = vpop.permute.xlu0 %636
          %vm638 = vcmask 15360
          %v639 = vsel %vm638, %v631, %v633
          %v640 = vsel %vm638, %v635, %v637
          %643 = vst [vmem:[%s388] sm:$0xff] %v639
          %644 = vst [vmem:[%s388 + $0x8] sm:$0xff] %v640
          %v645 = vmul.f32 %v622, 2.0
          %v646 = vmul.f32 %v623, 2.0
          %v647 = vmul.f32 %v624, 2.0
          %v648 = vmul.f32 %v625, 2.0
          %653 = vrot.lane.b32.xlu0 %v645, 2
          %v654 = vpop.permute.xlu0 %653
          %655 = vrot.lane.b32.xlu0 %v646, 2
          %v656 = vpop.permute.xlu0 %655
          %657 = vrot.lane.b32.xlu0 %v647, 2
          %v658 = vpop.permute.xlu0 %657
          %659 = vrot.lane.b32.xlu0 %v648, 2
          %v660 = vpop.permute.xlu0 %659
          %v661 = vsel %vm638, %v654, %v656
          %v662 = vsel %vm638, %v658, %v660
          %s665 = scalar_lea.vmem %s388, 16 [#allocation12]
          %666 = vst [vmem:[%s665] sm:$0xff] %v661
          %667 = vst [vmem:[%s665 + $0x8] sm:$0xff] %v662
          %v668 = vld [vmem:[#allocation3 + $0x8] sm:$0xff]
          %v669 = vld [vmem:[#allocation3 + $0x20] sm:$0xff]
          %670 = vst [vmem:[#allocation3] sm:$0xff] %v668
          %671 = vst [vmem:[#allocation3 + $0x18] sm:$0xff] %v669
          %v672 = vld [vmem:[%s547 + $0x8] sm:$0xff]
          %v673 = vld [vmem:[%s547 + $0x20] sm:$0xff]
          %674 = vst [vmem:[%s547] sm:$0xff] %v672
          %675 = vst [vmem:[%s547 + $0x18] sm:$0xff] %v673
        $region60: #{tpu_custom_call.1} parent=35 // pred_fallthru
          _
        %676 = vst [vmem:[#allocation3 + $0x8] sm:$0xff] %v428
        %677 = vst [vmem:[#allocation3 + $0x20] sm:$0xff] %v429
        %s678 = scalar_lea.vmem [#allocation3], 48
        %679 = vst [vmem:[%s678 + $0x8] sm:$0xff] %v443
        %680 = vst [vmem:[%s678 + $0x20] sm:$0xff] %v444
        %s681 = sand.u32 %s183, 1
        %s682 = scalar_lea.sflag [#allocation6], %s681
        %s683 = sand.u32 %s183, 1
        %s684 = smul.addr %s683, 32
        %s685 = scalar_lea.vmem [#allocation12], %s684
        // Predicated region
        $region61: #{tpu_custom_call.1} parent=35 // pred_check
          %p686 = pneg %p193
        $region62: #{tpu_custom_call.1} parent=35 // pred_check_branch
          %688 = sbr.rel (%p686) target = $region64
        $region63: #{tpu_custom_call.1} parent=35 // pred_region
          %s689 = ssub.s32 %s32, 1
          %p690 = scmp.gt.s32.totalorder %s689, 0
          %s691 = scalar_select %p690, %s689, 0
          %s693 = ssub.s32 512, 512
          %694 = vsyncadd %s682, %s693
          %s695 = smul.addr %s31, 12
          %s696 = sadd.s32 %s691, %s695
          %s697 = smul.addr %s696, 128
          %s698 = scalar_lea.hbm %s4, %s697
          %s699 = sshll.u32 %s685, 4
          %s700 = int_to_ptr.vmem [resolvable:$true] %s699
          %705 = dma.vmem_to_hbm [thread:$0]  %s700, 512, %s698, %s682, 128, 384, 8
        $region64: #{tpu_custom_call.1} parent=35 // pred_fallthru
          _
      $region36: #{tpu_custom_call.1} parent=5 // pred_fallthru
        _
      %p706 = scmp.le.s32.totalorder 2, %s22
      // Predicated region
      $region65: #{tpu_custom_call.1} parent=5 // pred_check
        %p707 = pneg %p706
      $region66: #{tpu_custom_call.1} parent=5 // pred_check_branch
        %709 = sbr.rel (%p707) target = $region68
      $region67: #{tpu_custom_call.1} parent=5 // pred_region
        %s710 = ssub.s32 %s22, 2
        // Predicated region
        $region69: #{tpu_custom_call.1} parent=67 // pred_check
          %p711 = pneg %p199
        $region70: #{tpu_custom_call.1} parent=67 // pred_check_branch
          %713 = sbr.rel (%p711) target = $region72
        $region71: #{tpu_custom_call.1} parent=67 // pred_region
          %s714 = sand.u32 %s184, 1
          %s715 = scalar_lea.sflag [#allocation6], %s714
          %s716 = sand.u32 %s184, 1
          %s717 = smul.addr %s716, 32
          %s718 = scalar_lea.vmem [#allocation12], %s717
          %719 = dma.done %s715, 512
        $region72: #{tpu_custom_call.1} parent=67 // pred_fallthru
          _
      $region68: #{tpu_custom_call.1} parent=5 // pred_fallthru
        _
    $region6: #{tpu_custom_call.1} parent=1 // loop_footer
      %s26 = sadd.s32 1, %s22
    $region7: #{tpu_custom_call.1} parent=1 // loop_footer_branch
      %21 = sbr.rel target = $region3
    $region8: #{tpu_custom_call.1} parent=1 // loop_exit
      _
    %720 = vsyncpa [#allocation5], 1
    %s721 = scalar_lea.sflag [#allocation5], 1
    %722 = vsyncpa %s721, 1
    %723 = vsyncpa [#allocation8], 1
    %s724 = scalar_lea.sflag [#allocation8], 1
    %725 = vsyncpa %s724, 1
    %726 = vsyncpa [#allocation11], 1
    %s727 = scalar_lea.sflag [#allocation11], 1
    %728 = vsyncpa %s727, 1
    %729 = vsyncpa [#allocation6], 1
    %s730 = scalar_lea.sflag [#allocation6], 1
    %731 = vsyncpa %s730, 1

</llo_original>
